<compile_context>
chip_gen: v5e
topology: v5e:2x2
jax: 0.10.0
libtpu: 0.0.40
codegen_flags: <defaults>
</compile_context>

<pallas_src>
import jax
import jax.numpy as jnp
from jax.experimental import pallas as pl
from jax.experimental.pallas import tpu as pltpu


def _round_up(n, m):
    return ((n + m - 1) // m) * m


def _make_pnn_kernel(n_heads, out_width):
    """h = relu(x@W1+b1) computed once; one fused head matmul; per-head column split."""

    def kernel(x_ref, w1_ref, b1_ref, wh_ref, bh_ref, *out_refs):
        # bf16 operands on the MXU, f32 accumulation.  If the caller already passed
        # bf16 x this cast is a no-op; f32 x is cast in-kernel (never in the wrapper).
        xb = x_ref[...].astype(jnp.bfloat16)
        h = jnp.dot(xb, w1_ref[...], preferred_element_type=jnp.float32) + b1_ref[...]
        h = jnp.maximum(h, 0.0)            # f32 VPU elementwise
        hb = h.astype(jnp.bfloat16)        # downcast once, reused by the fused head matmul

        # One MXU stream for all requested heads: (tm, Hp) @ (Hp, n_heads*O).
        y = jnp.dot(hb, wh_ref[...], preferred_element_type=jnp.float32) + bh_ref[...]
        for k in range(n_heads):           # static Python loop (n_heads in {1, 2})
            out_refs[k][...] = y[:, k * out_width:(k + 1) * out_width].astype(
                out_refs[k].dtype)

    return kernel


def _pnn_call(x, w1, b1, wh, bh, *, n_heads, out_width, tm=None,
              out_dtype=jnp.float32):
    """Run the fused PNN kernel.

    x:  (B, K) f32 or bf16
    w1: (K, Hp) bf16 (Hp multiple of 128, zero-padded columns)
    b1: (1, Hp) f32
    wh: (Hp, n_heads*out_width) bf16   (heads concatenated along columns)
    bh: (1, n_heads*out_width) f32
    Returns a tuple of n_heads arrays of shape (B, out_width), dtype out_dtype.
    """
    B, K = x.shape
    Hp = w1.shape[1]
    Ncat = wh.shape[1]
    assert Ncat == n_heads * out_width

    # Large batch tiles: per-grid-step overhead (~0.35 us) dominates compute at these
    # feature sizes, so make tiles big.  tm multiple of 16 (bf16 sublane packing).
    if tm is None:
        tm = min(2048, _round_up(max(B, 16), 16))
    assert tm % 8 == 0
    grid = (pl.cdiv(B, tm),)   # ragged tail allowed: overhanging rows masked on store

    def resident(shape):
        # Same block index every grid step -> stays resident in VMEM.
        return pl.BlockSpec(shape, lambda i: (0, 0))

    in_specs = [
        pl.BlockSpec((tm, K), lambda i: (i, 0)),   # x: tiled over batch
        resident((K, Hp)),                         # w1
        resident((1, Hp)),                         # b1
        resident((Hp, Ncat)),                      # concatenated head weights
        resident((1, Ncat)),                       # concatenated head biases
    ]
    out_shape = tuple(
        jax.ShapeDtypeStruct((B, out_width), out_dtype) for _ in range(n_heads)
    )
    out_specs = tuple(
        pl.BlockSpec((tm, out_width), lambda i: (i, 0)) for _ in range(n_heads)
    )

    kernel = _make_pnn_kernel(n_heads, out_width)

    def run(sem):
        return pl.pallas_call(
            kernel,
            grid=grid,
            in_specs=in_specs,
            out_specs=out_specs if n_heads > 1 else out_specs[0],
            out_shape=out_shape if n_heads > 1 else out_shape[0],
            compiler_params=pltpu.CompilerParams(dimension_semantics=(sem,)),
        )(x, w1, b1, wh, bh)

    if grid[0] > 1:
        # Row tiles are disjoint -> safe to shard the batch axis across TensorCores
        # (v7x).  Fall back gracefully where CORE_PARALLEL is not supported.
        try:
            outs = run(pltpu.CORE_PARALLEL)
            jax.block_until_ready(outs)
        except Exception:
            outs = run("parallel")
    else:
        outs = run("parallel")

    if n_heads == 1:
        outs = (outs,)
    return outs


def progressive_nn_forward(x, prepared, task=1, *, tm=None):
    """Single-task forward (matches ProgressiveNN.forward(x, task))."""
    if task == 1:
        wh, bh = prepared["w2"], prepared["b2"]
    elif task == 2:
        wh, bh = prepared["w3"], prepared["b3"]
    else:
        raise ValueError("task must be 1 or 2")
    (y,) = _pnn_call(x, prepared["w1"], prepared["b1"], wh, bh,
                     n_heads=1, out_width=prepared["output_size"], tm=tm)
    return y


def progressive_nn_forward_both(x, prepared, *, tm=None):
    """Fused forward: both task heads from a single launch, shared layer 1, one fused
    head matmul against the pre-concatenated (Hp, 2*O) weight."""
    return _pnn_call(x, prepared["w1"], prepared["b1"],
                     prepared["w23"], prepared["b23"],
                     n_heads=2, out_width=prepared["output_size"], tm=tm)


def init_params(key, input_size, hidden_size, output_size):
    """Deterministic init mirroring the PyTorch module: weights ~ N(0, 1) (.normal_()),
    biases from default Linear init (uniform in [-1/sqrt(fan_in), 1/sqrt(fan_in)]).
    Stored (in, out) so the kernel computes y = x @ W + b."""
    k1, k2, k3, kb1, kb2, kb3 = jax.random.split(key, 6)
    w1 = jax.random.normal(k1, (input_size, hidden_size), jnp.float32)
    w2 = jax.random.normal(k2, (hidden_size, output_size), jnp.float32)
    w3 = jax.random.normal(k3, (hidden_size, output_size), jnp.float32)
    bound1 = 1.0 / jnp.sqrt(jnp.float32(input_size))
    bound2 = 1.0 / jnp.sqrt(jnp.float32(hidden_size))
    b1 = jax.random.uniform(kb1, (1, hidden_size), jnp.float32, -bound1, bound1)
    b2 = jax.random.uniform(kb2, (1, output_size), jnp.float32, -bound2, bound2)
    b3 = jax.random.uniform(kb3, (1, output_size), jnp.float32, -bound2, bound2)
    return {"w1": w1, "b1": b1, "w2": w2, "b2": b2, "w3": w3, "b3": b3}


def prepare_params(params):
    """One-time prep: zero-pad the hidden dim to a multiple of 128 (cheap, resident
    weights; exact because padded h columns are relu(0)=0), cast weights to bf16 for
    the MXU, and pre-concatenate the two heads for the fused-head matmul.  Output
    columns are NOT padded (kernel writes lane-exact (tm, O) blocks)."""
    K, H = params["w1"].shape
    O = params["w2"].shape[1]
    Hp = _round_up(H, 128)

    w1 = jnp.pad(params["w1"], ((0, 0), (0, Hp - H))).astype(jnp.bfloat16)
    b1 = jnp.pad(params["b1"], ((0, 0), (0, Hp - H))).astype(jnp.float32)

    def pad_head(w):
        return jnp.pad(w, ((0, Hp - H), (0, 0))).astype(jnp.bfloat16)

    w2, w3 = pad_head(params["w2"]), pad_head(params["w3"])
    b2 = params["b2"].astype(jnp.float32)
    b3 = params["b3"].astype(jnp.float32)
    return {
        "w1": w1, "b1": b1,
        "w2": w2, "b2": b2,
        "w3": w3, "b3": b3,
        "w23": jnp.concatenate([w2, w3], axis=1),
        "b23": jnp.concatenate([b2, b3], axis=1),
        "output_size": O,
    }


def _reference_forward(x, params, task=1):
    """Pure-JAX reference following the same bf16-weight / f32-accumulate numerics."""
    f32 = jnp.float32
    xb = x.astype(jnp.bfloat16).astype(f32)
    w1 = params["w1"].astype(jnp.bfloat16).astype(f32)
    h = jnp.maximum(xb @ w1 + params["b1"], 0.0)
    hb = h.astype(jnp.bfloat16).astype(f32)
    if task == 1:
        wh, bh = params["w2"], params["b2"]
    else:
        wh, bh = params["w3"], params["b3"]
    return hb @ wh.astype(jnp.bfloat16).astype(f32) + bh


if __name__ == "__main__":
    key = jax.random.PRNGKey(0)
    k_params, k_x = jax.random.split(key)

    # Small shapes consistent with the module; batch is deliberately NOT a multiple of
    # the tile size to exercise the pad-free ragged-tail path.
    batch, input_size, hidden_size, output_size = 250, 32, 32, 16
    params = init_params(k_params, input_size, hidden_size, output_size)
    prepared = prepare_params(params)
    x = jax.random.normal(k_x, (batch, input_size), jnp.float32)

    # Fused kernel: both task heads, one launch, shared first layer, one head matmul.
    # tm=64 exercises a multi-step grid (and CORE_PARALLEL where available); use the
    # default tm (<=2048) for large batches.
    y1, y2 = progressive_nn_forward_both(x, prepared, tm=64)

    # Single-task API (matches the PyTorch forward(x, task) signature), default tm.
    y1_single = progressive_nn_forward(x, prepared, task=1)
    y2_single = progressive_nn_forward(x, prepared, task=2)
    jax.block_until_ready((y1, y2, y1_single, y2_single))

    # Correctness against a pure-JAX reference with matching numerics.
    ref1 = _reference_forward(x, params, task=1)
    ref2 = _reference_forward(x, params, task=2)
    assert y1.shape == (batch, output_size) and y2.shape == (batch, output_size)
    assert jnp.allclose(y1, ref1, atol=1e-2, rtol=1e-3)
    assert jnp.allclose(y2, ref2, atol=1e-2, rtol=1e-3)
    assert jnp.allclose(y1_single, y1, atol=1e-5, rtol=1e-5)
    assert jnp.allclose(y2_single, y2, atol=1e-5, rtol=1e-5)

    print("KERNEL_OK")
</pallas_src>

<mosaic_0001>
module attributes {stable_mosaic.version = 11 : i64} {
  func.func @kernel(%arg0: i32, %arg1: memref<64x32xf32, #tpu.memory_space<vmem>>, %arg2: memref<32x128xbf16, #tpu.memory_space<vmem>>, %arg3: memref<1x128xf32, #tpu.memory_space<vmem>>, %arg4: memref<128x32xbf16, #tpu.memory_space<vmem>>, %arg5: memref<1x32xf32, #tpu.memory_space<vmem>>, %arg6: memref<64x16xf32, #tpu.memory_space<vmem>>, %arg7: memref<64x16xf32, #tpu.memory_space<vmem>>) attributes {dimension_semantics = [#tpu.dimension_semantics<core_parallel>], iteration_bounds = array<i64: 4>, scalar_prefetch = 0 : i64, scratch_operands = 0 : i64, tpu.core_type = #tpu.core_type<tc>, window_params = [{transform_indices = @transform_0, window_bounds = array<i64: 64, 32>}, {pipeline_mode = #tpu.pipeline_mode<synchronous>, transform_indices = @transform_1, window_bounds = array<i64: 32, 128>}, {pipeline_mode = #tpu.pipeline_mode<synchronous>, transform_indices = @transform_2, window_bounds = array<i64: 1, 128>}, {pipeline_mode = #tpu.pipeline_mode<synchronous>, transform_indices = @transform_3, window_bounds = array<i64: 128, 32>}, {pipeline_mode = #tpu.pipeline_mode<synchronous>, transform_indices = @transform_4, window_bounds = array<i64: 1, 32>}, {transform_indices = @transform_5, window_bounds = array<i64: 64, 16>}, {transform_indices = @transform_6, window_bounds = array<i64: 64, 16>}]} {
    %c0 = arith.constant 0 : index
    %c0_0 = arith.constant 0 : index
    %0 = vector.load %arg1[%c0, %c0_0] : memref<64x32xf32, #tpu.memory_space<vmem>>, vector<64x32xf32>
    %1 = arith.truncf %0 : vector<64x32xf32> to vector<64x32xbf16>
    %c0_1 = arith.constant 0 : index
    %c0_2 = arith.constant 0 : index
    %2 = vector.load %arg2[%c0_1, %c0_2] : memref<32x128xbf16, #tpu.memory_space<vmem>>, vector<32x128xbf16>
    %cst = arith.constant dense<0.000000e+00> : vector<64x128xf32>
    %3 = tpu.matmul %1, %2, %cst {dimension_numbers = #tpu.dot_dimension_numbers<[1], [0], [0], [1], [0, 0, 1, 1], [], []>} : vector<64x32xbf16>, vector<32x128xbf16>, vector<64x128xf32> -> vector<64x128xf32>
    %c0_3 = arith.constant 0 : index
    %c0_4 = arith.constant 0 : index
    %4 = vector.load %arg3[%c0_3, %c0_4] : memref<1x128xf32, #tpu.memory_space<vmem>>, vector<1x128xf32>
    %5 = vector.broadcast %4 : vector<1x128xf32> to vector<64x128xf32>
    %6 = arith.addf %3, %5 : vector<64x128xf32>
    %cst_5 = arith.constant 0.000000e+00 : f32
    %7 = vector.broadcast %cst_5 : f32 to vector<64x128xf32>
    %8 = arith.maximumf %6, %7 : vector<64x128xf32>
    %9 = arith.truncf %8 : vector<64x128xf32> to vector<64x128xbf16>
    %c0_6 = arith.constant 0 : index
    %c0_7 = arith.constant 0 : index
    %10 = vector.load %arg4[%c0_6, %c0_7] : memref<128x32xbf16, #tpu.memory_space<vmem>>, vector<128x32xbf16>
    %cst_8 = arith.constant dense<0.000000e+00> : vector<64x32xf32>
    %11 = tpu.matmul %9, %10, %cst_8 {dimension_numbers = #tpu.dot_dimension_numbers<[1], [0], [0], [1], [0, 0, 1, 1], [], []>} : vector<64x128xbf16>, vector<128x32xbf16>, vector<64x32xf32> -> vector<64x32xf32>
    %c0_9 = arith.constant 0 : index
    %c0_10 = arith.constant 0 : index
    %12 = vector.load %arg5[%c0_9, %c0_10] : memref<1x32xf32, #tpu.memory_space<vmem>>, vector<1x32xf32>
    %13 = vector.broadcast %12 : vector<1x32xf32> to vector<64x32xf32>
    %14 = arith.addf %11, %13 : vector<64x32xf32>
    %15 = vector.extract_strided_slice %14 {offsets = [0, 0], sizes = [64, 16], strides = [1, 1]} : vector<64x32xf32> to vector<64x16xf32>
    %c0_11 = arith.constant 0 : index
    %c0_12 = arith.constant 0 : index
    %16 = vector.load %arg6[%c0_11, %c0_12] : memref<64x16xf32, #tpu.memory_space<vmem>>, vector<64x16xf32>
    tpu.vector_store %arg6[%c0_11, %c0_12], %15 {strides = array<i32>} : memref<64x16xf32, #tpu.memory_space<vmem>>, vector<64x16xf32>,
    %17 = vector.extract_strided_slice %14 {offsets = [0, 16], sizes = [64, 16], strides = [1, 1]} : vector<64x32xf32> to vector<64x16xf32>
    %c0_13 = arith.constant 0 : index
    %c0_14 = arith.constant 0 : index
    %18 = vector.load %arg7[%c0_13, %c0_14] : memref<64x16xf32, #tpu.memory_space<vmem>>, vector<64x16xf32>
    tpu.vector_store %arg7[%c0_13, %c0_14], %17 {strides = array<i32>} : memref<64x16xf32, #tpu.memory_space<vmem>>, vector<64x16xf32>,
    return
  }
  func.func @transform_0(%arg0: i32) -> (i32, i32) {
    %c0_i32 = arith.constant 0 : i32
    %c0_i32_0 = arith.constant 0 : i32
    return %arg0, %c0_i32 : i32, i32
  }
  func.func @transform_1(%arg0: i32) -> (i32, i32) {
    %c0_i32 = arith.constant 0 : i32
    %c0_i32_0 = arith.constant 0 : i32
    %c0_i32_1 = arith.constant 0 : i32
    return %c0_i32, %c0_i32_0 : i32, i32
  }
  func.func @transform_2(%arg0: i32) -> (i32, i32) {
    %c0_i32 = arith.constant 0 : i32
    %c0_i32_0 = arith.constant 0 : i32
    %c0_i32_1 = arith.constant 0 : i32
    return %c0_i32, %c0_i32_0 : i32, i32
  }
  func.func @transform_3(%arg0: i32) -> (i32, i32) {
    %c0_i32 = arith.constant 0 : i32
    %c0_i32_0 = arith.constant 0 : i32
    %c0_i32_1 = arith.constant 0 : i32
    return %c0_i32, %c0_i32_0 : i32, i32
  }
  func.func @transform_4(%arg0: i32) -> (i32, i32) {
    %c0_i32 = arith.constant 0 : i32
    %c0_i32_0 = arith.constant 0 : i32
    %c0_i32_1 = arith.constant 0 : i32
    return %c0_i32, %c0_i32_0 : i32, i32
  }
  func.func @transform_5(%arg0: i32) -> (i32, i32) {
    %c0_i32 = arith.constant 0 : i32
    %c0_i32_0 = arith.constant 0 : i32
    return %arg0, %c0_i32 : i32, i32
  }
  func.func @transform_6(%arg0: i32) -> (i32, i32) {
    %c0_i32 = arith.constant 0 : i32
    %c0_i32_0 = arith.constant 0 : i32
    return %arg0, %c0_i32 : i32, i32
  }
}

module attributes {stable_mosaic.version = 11 : i64} {
  func.func @kernel(%arg0: i32, %arg1: memref<64x32xf32, #tpu.memory_space<vmem>>, %arg2: memref<32x128xbf16, #tpu.memory_space<vmem>>, %arg3: memref<1x128xf32, #tpu.memory_space<vmem>>, %arg4: memref<128x32xbf16, #tpu.memory_space<vmem>>, %arg5: memref<1x32xf32, #tpu.memory_space<vmem>>, %arg6: memref<64x16xf32, #tpu.memory_space<vmem>>, %arg7: memref<64x16xf32, #tpu.memory_space<vmem>>) attributes {dimension_semantics = [#tpu.dimension_semantics<parallel>], iteration_bounds = array<i64: 4>, scalar_prefetch = 0 : i64, scratch_operands = 0 : i64, tpu.core_type = #tpu.core_type<tc>, window_params = [{transform_indices = @transform_0, window_bounds = array<i64: 64, 32>}, {pipeline_mode = #tpu.pipeline_mode<synchronous>, transform_indices = @transform_1, window_bounds = array<i64: 32, 128>}, {pipeline_mode = #tpu.pipeline_mode<synchronous>, transform_indices = @transform_2, window_bounds = array<i64: 1, 128>}, {pipeline_mode = #tpu.pipeline_mode<synchronous>, transform_indices = @transform_3, window_bounds = array<i64: 128, 32>}, {pipeline_mode = #tpu.pipeline_mode<synchronous>, transform_indices = @transform_4, window_bounds = array<i64: 1, 32>}, {transform_indices = @transform_5, window_bounds = array<i64: 64, 16>}, {transform_indices = @transform_6, window_bounds = array<i64: 64, 16>}]} {
    %c0 = arith.constant 0 : index
    %c0_0 = arith.constant 0 : index
    %0 = vector.load %arg1[%c0, %c0_0] : memref<64x32xf32, #tpu.memory_space<vmem>>, vector<64x32xf32>
    %1 = arith.truncf %0 : vector<64x32xf32> to vector<64x32xbf16>
    %c0_1 = arith.constant 0 : index
    %c0_2 = arith.constant 0 : index
    %2 = vector.load %arg2[%c0_1, %c0_2] : memref<32x128xbf16, #tpu.memory_space<vmem>>, vector<32x128xbf16>
    %cst = arith.constant dense<0.000000e+00> : vector<64x128xf32>
    %3 = tpu.matmul %1, %2, %cst {dimension_numbers = #tpu.dot_dimension_numbers<[1], [0], [0], [1], [0, 0, 1, 1], [], []>} : vector<64x32xbf16>, vector<32x128xbf16>, vector<64x128xf32> -> vector<64x128xf32>
    %c0_3 = arith.constant 0 : index
    %c0_4 = arith.constant 0 : index
    %4 = vector.load %arg3[%c0_3, %c0_4] : memref<1x128xf32, #tpu.memory_space<vmem>>, vector<1x128xf32>
    %5 = vector.broadcast %4 : vector<1x128xf32> to vector<64x128xf32>
    %6 = arith.addf %3, %5 : vector<64x128xf32>
    %cst_5 = arith.constant 0.000000e+00 : f32
    %7 = vector.broadcast %cst_5 : f32 to vector<64x128xf32>
    %8 = arith.maximumf %6, %7 : vector<64x128xf32>
    %9 = arith.truncf %8 : vector<64x128xf32> to vector<64x128xbf16>
    %c0_6 = arith.constant 0 : index
    %c0_7 = arith.constant 0 : index
    %10 = vector.load %arg4[%c0_6, %c0_7] : memref<128x32xbf16, #tpu.memory_space<vmem>>, vector<128x32xbf16>
    %cst_8 = arith.constant dense<0.000000e+00> : vector<64x32xf32>
    %11 = tpu.matmul %9, %10, %cst_8 {dimension_numbers = #tpu.dot_dimension_numbers<[1], [0], [0], [1], [0, 0, 1, 1], [], []>} : vector<64x128xbf16>, vector<128x32xbf16>, vector<64x32xf32> -> vector<64x32xf32>
    %c0_9 = arith.constant 0 : index
    %c0_10 = arith.constant 0 : index
    %12 = vector.load %arg5[%c0_9, %c0_10] : memref<1x32xf32, #tpu.memory_space<vmem>>, vector<1x32xf32>
    %13 = vector.broadcast %12 : vector<1x32xf32> to vector<64x32xf32>
    %14 = arith.addf %11, %13 : vector<64x32xf32>
    %15 = vector.extract_strided_slice %14 {offsets = [0, 0], sizes = [64, 16], strides = [1, 1]} : vector<64x32xf32> to vector<64x16xf32>
    %c0_11 = arith.constant 0 : index
    %c0_12 = arith.constant 0 : index
    %16 = vector.load %arg6[%c0_11, %c0_12] : memref<64x16xf32, #tpu.memory_space<vmem>>, vector<64x16xf32>
    tpu.vector_store %arg6[%c0_11, %c0_12], %15 {strides = array<i32>} : memref<64x16xf32, #tpu.memory_space<vmem>>, vector<64x16xf32>,
    %17 = vector.extract_strided_slice %14 {offsets = [0, 16], sizes = [64, 16], strides = [1, 1]} : vector<64x32xf32> to vector<64x16xf32>
    %c0_13 = arith.constant 0 : index
    %c0_14 = arith.constant 0 : index
    %18 = vector.load %arg7[%c0_13, %c0_14] : memref<64x16xf32, #tpu.memory_space<vmem>>, vector<64x16xf32>
    tpu.vector_store %arg7[%c0_13, %c0_14], %17 {strides = array<i32>} : memref<64x16xf32, #tpu.memory_space<vmem>>, vector<64x16xf32>,
    return
  }
  func.func @transform_0(%arg0: i32) -> (i32, i32) {
    %c0_i32 = arith.constant 0 : i32
    %c0_i32_0 = arith.constant 0 : i32
    return %arg0, %c0_i32 : i32, i32
  }
  func.func @transform_1(%arg0: i32) -> (i32, i32) {
    %c0_i32 = arith.constant 0 : i32
    %c0_i32_0 = arith.constant 0 : i32
    %c0_i32_1 = arith.constant 0 : i32
    return %c0_i32, %c0_i32_0 : i32, i32
  }
  func.func @transform_2(%arg0: i32) -> (i32, i32) {
    %c0_i32 = arith.constant 0 : i32
    %c0_i32_0 = arith.constant 0 : i32
    %c0_i32_1 = arith.constant 0 : i32
    return %c0_i32, %c0_i32_0 : i32, i32
  }
  func.func @transform_3(%arg0: i32) -> (i32, i32) {
    %c0_i32 = arith.constant 0 : i32
    %c0_i32_0 = arith.constant 0 : i32
    %c0_i32_1 = arith.constant 0 : i32
    return %c0_i32, %c0_i32_0 : i32, i32
  }
  func.func @transform_4(%arg0: i32) -> (i32, i32) {
    %c0_i32 = arith.constant 0 : i32
    %c0_i32_0 = arith.constant 0 : i32
    %c0_i32_1 = arith.constant 0 : i32
    return %c0_i32, %c0_i32_0 : i32, i32
  }
  func.func @transform_5(%arg0: i32) -> (i32, i32) {
    %c0_i32 = arith.constant 0 : i32
    %c0_i32_0 = arith.constant 0 : i32
    return %arg0, %c0_i32 : i32, i32
  }
  func.func @transform_6(%arg0: i32) -> (i32, i32) {
    %c0_i32 = arith.constant 0 : i32
    %c0_i32_0 = arith.constant 0 : i32
    return %arg0, %c0_i32 : i32, i32
  }
}

</mosaic_0001>

<llo_original>
// kernel: tpu_custom_call.1
$region0: #{tpu_custom_call.1}
  #allocation0 [shape = 'u32[]', space=smem, size = 0x4, offset = 0x4, fixed_abs, tag = 'smem constant byte address 0x4 - core index']
  #allocation1 [shape = 'u32[72,128]{1,0:T(1,128)}', space=vmem, size = 0x9000, scoped, tag = 'internal scratch']
  %s0 = inlined_call_operand.vmem [shape: f32[250,32], index: 0, kind: input, shape index: {}]
  %s1 = inlined_call_operand.vmem [shape: bf16[32,128], index: 1, kind: input, shape index: {}]
  %s2 = inlined_call_operand.vmem [shape: f32[1,128], index: 2, kind: input, shape index: {}]
  %s3 = inlined_call_operand.vmem [shape: bf16[128,32], index: 3, kind: input, shape index: {}]
  %s4 = inlined_call_operand.vmem [shape: f32[1,32], index: 4, kind: input, shape index: {}]
  %s5 = inlined_call_operand.vmem [shape: f32[250,16], index: 5, kind: output, shape index: {0}]
  %s6 = inlined_call_operand.vmem [shape: f32[250,16], index: 6, kind: output, shape index: {1}]
  %7 = xla_tuple %s5, %s6
  %s8 = sld [smem:[#allocation0]]
  $region61: #{tpu_custom_call.1} parent=0
    _
  %s10 = ssub.s32 1, %s8
  %s11 = scalar_select 0, %s10, %s8
  loop: start=0, step=1, limit=6
  $region2: #{tpu_custom_call.1} parent=0 // loop_pre_header
    _
  $region3: #{tpu_custom_call.1} parent=0 // loop_header
    %s13 = sphi 0, %s17
    %p14 = scmp.ge.s32.totalorder %s13, 6
    %s23 = sphi 0, %s25
    %s26 = sphi 0, %s23
    %s27 = sphi 0, %s26
    %s43 = sphi 0, %s27
    %s47 = sphi 0, %s47
    %s49 = sphi 0, %s47
    %s50 = sphi 0, %s49
    %s64 = sphi 0, %s50
    %s68 = sphi 0, %s68
    %s70 = sphi 0, %s68
    %s71 = sphi 0, %s70
    %s85 = sphi 0, %s71
    %s89 = sphi 0, %s89
    %s91 = sphi 0, %s89
    %s92 = sphi 0, %s91
    %s106 = sphi 0, %s92
    %s110 = sphi 0, %s110
    %s112 = sphi 0, %s110
    %s113 = sphi 0, %s112
    %s127 = sphi 0, %s113
    %s133 = sphi 0, %s135
    %s136 = sphi 0, %s133
    %s137 = sphi 0, %s136
    %s153 = sphi 0, %s137
    %s159 = sphi 0, %s161
    %s162 = sphi 0, %s159
    %s163 = sphi 0, %s162
    %s179 = sphi 0, %s163
  $region4: #{tpu_custom_call.1} parent=0 // loop_header_branch
    %16 = sbr.rel (%p14) target = $region8
  $region5: #{tpu_custom_call.1} parent=0 // loop_body
    %s18 = ssub.s32 %s13, 1
    %s19 = ssub.s32 %s13, 2
    %s20 = sadd.s32 %s13, 1
    %s21 = ssub.s32 %s13, %s20
    %p22 = scmp.eq.s32.totalorder %s21, 0
    %s24 = sadd.s32 %s23, 1
    %s25 = scalar_select %p22, %s23, %s24
    %p28 = pneg %p22
    %p29 = scmp.eq.s32.totalorder %s13, 3
    %p30 = por %p28, %p29
    %p31 = scmp.ne.s32.totalorder %s23, %s26
    %p32 = scmp.eq.s32.totalorder %s13, 0
    %p33 = por %p31, %p32
    %p34 = scmp.ne.s32.totalorder %s23, %s26
    %p35 = scmp.eq.s32.totalorder %s18, 3
    %p36 = por %p34, %p35
    %p37 = scmp.ne.s32.totalorder %s26, %s27
    %p38 = scmp.eq.s32.totalorder %s18, 0
    %p39 = por %p37, %p38
    %p40 = scmp.ne.s32.totalorder %s26, %s27
    %p41 = scmp.eq.s32.totalorder %s19, 3
    %p42 = por %p40, %p41
    %p44 = scmp.ne.s32.totalorder %s27, %s43
    %p45 = scmp.eq.s32.totalorder %s19, 0
    %p46 = por %p44, %p45
    %s48 = sadd.s32 %s47, 1
    %p51 = scmp.eq.s32.totalorder %s13, 3
    %p52 = scmp.ne.s32.totalorder %s47, %s49
    %p53 = scmp.eq.s32.totalorder %s13, 0
    %p54 = por %p52, %p53
    %p55 = scmp.ne.s32.totalorder %s47, %s49
    %p56 = scmp.eq.s32.totalorder %s18, 3
    %p57 = por %p55, %p56
    %p58 = scmp.ne.s32.totalorder %s49, %s50
    %p59 = scmp.eq.s32.totalorder %s18, 0
    %p60 = por %p58, %p59
    %p61 = scmp.ne.s32.totalorder %s49, %s50
    %p62 = scmp.eq.s32.totalorder %s19, 3
    %p63 = por %p61, %p62
    %p65 = scmp.ne.s32.totalorder %s50, %s64
    %p66 = scmp.eq.s32.totalorder %s19, 0
    %p67 = por %p65, %p66
    %s69 = sadd.s32 %s68, 1
    %p72 = scmp.eq.s32.totalorder %s13, 3
    %p73 = scmp.ne.s32.totalorder %s68, %s70
    %p74 = scmp.eq.s32.totalorder %s13, 0
    %p75 = por %p73, %p74
    %p76 = scmp.ne.s32.totalorder %s68, %s70
    %p77 = scmp.eq.s32.totalorder %s18, 3
    %p78 = por %p76, %p77
    %p79 = scmp.ne.s32.totalorder %s70, %s71
    %p80 = scmp.eq.s32.totalorder %s18, 0
    %p81 = por %p79, %p80
    %p82 = scmp.ne.s32.totalorder %s70, %s71
    %p83 = scmp.eq.s32.totalorder %s19, 3
    %p84 = por %p82, %p83
    %p86 = scmp.ne.s32.totalorder %s71, %s85
    %p87 = scmp.eq.s32.totalorder %s19, 0
    %p88 = por %p86, %p87
    %s90 = sadd.s32 %s89, 1
    %p93 = scmp.eq.s32.totalorder %s13, 3
    %p94 = scmp.ne.s32.totalorder %s89, %s91
    %p95 = scmp.eq.s32.totalorder %s13, 0
    %p96 = por %p94, %p95
    %p97 = scmp.ne.s32.totalorder %s89, %s91
    %p98 = scmp.eq.s32.totalorder %s18, 3
    %p99 = por %p97, %p98
    %p100 = scmp.ne.s32.totalorder %s91, %s92
    %p101 = scmp.eq.s32.totalorder %s18, 0
    %p102 = por %p100, %p101
    %p103 = scmp.ne.s32.totalorder %s91, %s92
    %p104 = scmp.eq.s32.totalorder %s19, 3
    %p105 = por %p103, %p104
    %p107 = scmp.ne.s32.totalorder %s92, %s106
    %p108 = scmp.eq.s32.totalorder %s19, 0
    %p109 = por %p107, %p108
    %s111 = sadd.s32 %s110, 1
    %p114 = scmp.eq.s32.totalorder %s13, 3
    %p115 = scmp.ne.s32.totalorder %s110, %s112
    %p116 = scmp.eq.s32.totalorder %s13, 0
    %p117 = por %p115, %p116
    %p118 = scmp.ne.s32.totalorder %s110, %s112
    %p119 = scmp.eq.s32.totalorder %s18, 3
    %p120 = por %p118, %p119
    %p121 = scmp.ne.s32.totalorder %s112, %s113
    %p122 = scmp.eq.s32.totalorder %s18, 0
    %p123 = por %p121, %p122
    %p124 = scmp.ne.s32.totalorder %s112, %s113
    %p125 = scmp.eq.s32.totalorder %s19, 3
    %p126 = por %p124, %p125
    %p128 = scmp.ne.s32.totalorder %s113, %s127
    %p129 = scmp.eq.s32.totalorder %s19, 0
    %p130 = por %p128, %p129
    %s131 = ssub.s32 %s13, %s20
    %p132 = scmp.eq.s32.totalorder %s131, 0
    %s134 = sadd.s32 %s133, 1
    %s135 = scalar_select %p132, %s133, %s134
    %p138 = pneg %p132
    %p139 = scmp.eq.s32.totalorder %s13, 3
    %p140 = por %p138, %p139
    %p141 = scmp.ne.s32.totalorder %s133, %s136
    %p142 = scmp.eq.s32.totalorder %s13, 0
    %p143 = por %p141, %p142
    %p144 = scmp.ne.s32.totalorder %s133, %s136
    %p145 = scmp.eq.s32.totalorder %s18, 3
    %p146 = por %p144, %p145
    %p147 = scmp.ne.s32.totalorder %s136, %s137
    %p148 = scmp.eq.s32.totalorder %s18, 0
    %p149 = por %p147, %p148
    %p150 = scmp.ne.s32.totalorder %s136, %s137
    %p151 = scmp.eq.s32.totalorder %s19, 3
    %p152 = por %p150, %p151
    %p154 = scmp.ne.s32.totalorder %s137, %s153
    %p155 = scmp.eq.s32.totalorder %s19, 0
    %p156 = por %p154, %p155
    %s157 = ssub.s32 %s13, %s20
    %p158 = scmp.eq.s32.totalorder %s157, 0
    %s160 = sadd.s32 %s159, 1
    %s161 = scalar_select %p158, %s159, %s160
    %p164 = pneg %p158
    %p165 = scmp.eq.s32.totalorder %s13, 3
    %p166 = por %p164, %p165
    %p167 = scmp.ne.s32.totalorder %s159, %s162
    %p168 = scmp.eq.s32.totalorder %s13, 0
    %p169 = por %p167, %p168
    %p170 = scmp.ne.s32.totalorder %s159, %s162
    %p171 = scmp.eq.s32.totalorder %s18, 3
    %p172 = por %p170, %p171
    %p173 = scmp.ne.s32.totalorder %s162, %s163
    %p174 = scmp.eq.s32.totalorder %s18, 0
    %p175 = por %p173, %p174
    %p176 = scmp.ne.s32.totalorder %s162, %s163
    %p177 = scmp.eq.s32.totalorder %s19, 3
    %p178 = por %p176, %p177
    %p180 = scmp.ne.s32.totalorder %s163, %s179
    %p181 = scmp.eq.s32.totalorder %s19, 0
    %p182 = por %p180, %p181
    %p183 = scmp.le.s32.totalorder 1, %s13
    %p184 = scmp.lt.s32.totalorder %s13, 5
    %p185 = pnand %p183, %p184
    %p186 = pneg %p185
    // Predicated region
    $region9: #{tpu_custom_call.1} parent=5 // pred_check
      _
    $region10: #{tpu_custom_call.1} parent=5 // pred_check_branch
      %188 = sbr.rel (%p185) target = $region12
    $region11: #{tpu_custom_call.1} parent=5 // pred_region
      %s189 = ssub.s32 %s13, 1
      // Predicated region
      $region13: #{tpu_custom_call.1} parent=11 // pred_check
        %p190 = pneg %p60
      $region14: #{tpu_custom_call.1} parent=11 // pred_check_branch
        %192 = sbr.rel (%p190) target = $region16
      $region15: #{tpu_custom_call.1} parent=11 // pred_region
        _
      $region16: #{tpu_custom_call.1} parent=11 // pred_fallthru
        _
      // Predicated region
      $region17: #{tpu_custom_call.1} parent=11 // pred_check
        %p193 = pneg %p81
      $region18: #{tpu_custom_call.1} parent=11 // pred_check_branch
        %195 = sbr.rel (%p193) target = $region20
      $region19: #{tpu_custom_call.1} parent=11 // pred_region
        _
      $region20: #{tpu_custom_call.1} parent=11 // pred_fallthru
        _
      // Predicated region
      $region21: #{tpu_custom_call.1} parent=11 // pred_check
        %p196 = pneg %p102
      $region22: #{tpu_custom_call.1} parent=11 // pred_check_branch
        %198 = sbr.rel (%p196) target = $region24
      $region23: #{tpu_custom_call.1} parent=11 // pred_region
        _
      $region24: #{tpu_custom_call.1} parent=11 // pred_fallthru
        _
      // Predicated region
      $region25: #{tpu_custom_call.1} parent=11 // pred_check
        %p199 = pneg %p123
      $region26: #{tpu_custom_call.1} parent=11 // pred_check_branch
        %201 = sbr.rel (%p199) target = $region28
      $region27: #{tpu_custom_call.1} parent=11 // pred_region
        _
      $region28: #{tpu_custom_call.1} parent=11 // pred_fallthru
        _
    $region12: #{tpu_custom_call.1} parent=5 // pred_fallthru
      _
    %p202 = scmp.lt.s32.totalorder %s13, 4
    // Predicated region
    $region29: #{tpu_custom_call.1} parent=5 // pred_check
      %p203 = pneg %p202
    $region30: #{tpu_custom_call.1} parent=5 // pred_check_branch
      %205 = sbr.rel (%p203) target = $region32
    $region31: #{tpu_custom_call.1} parent=5 // pred_region
      // Predicated region
      $region33: #{tpu_custom_call.1} parent=31 // pred_check
        %p206 = pneg %p33
      $region34: #{tpu_custom_call.1} parent=31 // pred_check_branch
        %208 = sbr.rel (%p206) target = $region36
      $region35: #{tpu_custom_call.1} parent=31 // pred_region
        %s209 = smul.u32 8, %s13
        %p210 = scmp.lt.s32.totalorder %s209, 31
        %s211 = scalar_select %p210, %s209, 31
        %s212 = smul.addr %s211, 8
        %s213 = scalar_lea.vmem %s0, %s212
        %s214 = smul.u32 8, %s13
      $region36: #{tpu_custom_call.1} parent=31 // pred_fallthru
        _
    $region32: #{tpu_custom_call.1} parent=5 // pred_fallthru
      _
    %p215 = scmp.le.s32.totalorder 1, %s13
    %p216 = scmp.lt.s32.totalorder %s13, 5
    %p217 = pnand %p215, %p216
    %p218 = pneg %p217
    // Predicated region
    $region37: #{tpu_custom_call.1} parent=5 // pred_check
      _
    $region38: #{tpu_custom_call.1} parent=5 // pred_check_branch
      %220 = sbr.rel (%p217) target = $region40
    $region39: #{tpu_custom_call.1} parent=5 // pred_region
      %s221 = ssub.s32 %s13, 1
      %s222 = smul.u32 8, %s18
      %p223 = scmp.lt.s32.totalorder %s222, 31
      %s224 = scalar_select %p223, %s222, 31
      %s225 = smul.addr %s224, 8
      %s226 = scalar_lea.vmem %s0, %s225
      %p227 = pneg %p39
      %p228 = pneg %p36
      %p229 = pneg %p60
      %p230 = pneg %p57
      %p231 = pneg %p81
      %p232 = pneg %p78
      %p233 = pneg %p102
      %p234 = pneg %p99
      %p235 = pneg %p123
      %p236 = pneg %p120
      %p237 = pneg %p149
      %p238 = pneg %p146
      %s239 = smul.u32 8, %s18
      %p240 = scmp.lt.s32.totalorder %s239, 31
      %s241 = scalar_select %p240, %s239, 31
      %s242 = smul.addr %s241, 8
      %s243 = scalar_lea.vmem %s5, %s242
      %p244 = pneg %p175
      %p245 = pneg %p172
      %s246 = smul.u32 8, %s18
      %p247 = scmp.lt.s32.totalorder %s246, 31
      %s248 = scalar_select %p247, %s246, 31
      %s249 = smul.addr %s248, 8
      %s250 = scalar_lea.vmem %s6, %s249
      %s251 = smul.u32 8, %s18
      %p252 = scmp.lt.s32.totalorder %s251, 31
      %s253 = scalar_select %p252, %s251, 31
      %s254 = smul.addr %s253, 8
      %s255 = scalar_lea.vmem %s0, %s254
      %s256 = smul.u32 8, %s18
      %s257 = smul.u32 8, %s18
      %p258 = scmp.lt.s32.totalorder %s257, 31
      %s259 = scalar_select %p258, %s257, 31
      %s260 = smul.addr %s259, 8
      %s261 = scalar_lea.vmem %s5, %s260
      %s262 = smul.u32 8, %s18
      %s263 = smul.u32 8, %s18
      %p264 = scmp.lt.s32.totalorder %s263, 31
      %s265 = scalar_select %p264, %s263, 31
      %s266 = smul.addr %s265, 8
      %s267 = scalar_lea.vmem %s6, %s266
      %s268 = smul.u32 8, %s18
      %v270 = vld [vmem:[%s255] sm:$0xff]
      %v271 = vld [vmem:[%s255 + $0x8] sm:$0xff]
      %v272 = vld [vmem:[%s255 + $0x10] sm:$0xff]
      %v273 = vld [vmem:[%s255 + $0x18] sm:$0xff]
      %v274 = vld [vmem:[%s255 + $0x20] sm:$0xff]
      %v275 = vld [vmem:[%s255 + $0x28] sm:$0xff]
      %v276 = vld [vmem:[%s255 + $0x30] sm:$0xff]
      %v277 = vld [vmem:[%s255 + $0x38] sm:$0xff]
      %v278 = vpack.c.bf16 %v271, %v270
      %v279 = vpack.c.bf16 %v273, %v272
      %v280 = vpack.c.bf16 %v275, %v274
      %v281 = vpack.c.bf16 %v277, %v276
      %v282 = vld [vmem:[%s1] sm:$0xf]
      %v283 = vld [vmem:[%s1 + $0x4] sm:$0xf]
      %v284 = vld [vmem:[%s1 + $0x8] sm:$0xf]
      %v285 = vld [vmem:[%s1 + $0xc] sm:$0xf]
      %v286 = vld [vmem:[%s2] sm:$0x1]
      %v288 = vperm.slane %v286, 0
      %v294 = vunpack.c.l.b16 %v282
      %v295 = vunpack.c.l.b16 %v283
      %v296 = vunpack.c.l.b16 %v284
      %v297 = vunpack.c.l.b16 %v285
      %v298 = vpack.c.b16 %v295, %v294
      %v299 = vpack.c.b16 %v297, %v296
      %vm302 = vcmask 261120
      %v304 = vsel %vm302, %v278, 0
      %v307 = vsel %vm302, %v279, 0
      %v310 = vsel %vm302, %v280, 0
      %v313 = vsel %vm302, %v281, 0
      %315 = vmatpush.bf16.msra.mxu0 0
      %316 = vmatpush.bf16.msra.mxu0 0
      %317 = vmatpush.bf16.msra.mxu0 0
      %318 = vmatpush.bf16.msra.mxu0 0
      %319 = vmatpush.bf16.msra.mxu0 0
      %320 = vmatpush.bf16.msra.mxu0 0
      %321 = vmatpush.bf16.msra.mxu0 %v299
      %322 = vmatpush.bf16.msra.mxu0 %v298
      %323 = vmatmul.bf16.gmra.mxu0 %v304
      %v324 = vpop.f32.mrf.mxu0
      %v325 = vadd.f32 %v288, %v324
      %v326 = vpop.f32.mrf.mxu0
      %v327 = vadd.f32 %v288, %v326
      %328 = vmatmul.bf16.gmra.mxu0 %v307
      %v329 = vpop.f32.mrf.mxu0
      %v330 = vadd.f32 %v288, %v329
      %v331 = vpop.f32.mrf.mxu0
      %v332 = vadd.f32 %v288, %v331
      %333 = vmatmul.bf16.gmra.mxu0 %v310
      %v334 = vpop.f32.mrf.mxu0
      %v335 = vadd.f32 %v288, %v334
      %v336 = vpop.f32.mrf.mxu0
      %v337 = vadd.f32 %v288, %v336
      %338 = vmatmul.bf16.gmra.mxu0 %v313
      %v339 = vpop.f32.mrf.mxu0
      %v340 = vadd.f32 %v288, %v339
      %v341 = vpop.f32.mrf.mxu0
      %v342 = vadd.f32 %v288, %v341
      %343 = vdwg.mxu0
      %v344 = vmax.f32 %v325, 0.0
      %v345 = vmax.f32 %v327, 0.0
      %v346 = vmax.f32 %v330, 0.0
      %v347 = vmax.f32 %v332, 0.0
      %v348 = vmax.f32 %v335, 0.0
      %v349 = vmax.f32 %v337, 0.0
      %v350 = vmax.f32 %v340, 0.0
      %v351 = vmax.f32 %v342, 0.0
      %v352 = vpack.c.bf16 %v345, %v344
      %v353 = vpack.c.bf16 %v347, %v346
      %v354 = vpack.c.bf16 %v349, %v348
      %v355 = vpack.c.bf16 %v351, %v350
      %v356 = vld [vmem:[%s3] sm:$0xf]
      %v357 = vld [vmem:[%s3 + $0x4] sm:$0xf]
      %v358 = vld [vmem:[%s3 + $0x8] sm:$0xf]
      %v359 = vld [vmem:[%s3 + $0xc] sm:$0xf]
      %v360 = vld [vmem:[%s3 + $0x10] sm:$0xf]
      %v361 = vld [vmem:[%s3 + $0x14] sm:$0xf]
      %v362 = vld [vmem:[%s3 + $0x18] sm:$0xf]
      %v363 = vld [vmem:[%s3 + $0x1c] sm:$0xf]
      %v364 = vld [vmem:[%s3 + $0x20] sm:$0xf]
      %v365 = vld [vmem:[%s3 + $0x24] sm:$0xf]
      %v366 = vld [vmem:[%s3 + $0x28] sm:$0xf]
      %v367 = vld [vmem:[%s3 + $0x2c] sm:$0xf]
      %v368 = vld [vmem:[%s3 + $0x30] sm:$0xf]
      %v369 = vld [vmem:[%s3 + $0x34] sm:$0xf]
      %v370 = vld [vmem:[%s3 + $0x38] sm:$0xf]
      %v371 = vld [vmem:[%s3 + $0x3c] sm:$0xf]
      %v372 = vld [vmem:[%s4] sm:$0x1]
      %v374 = vperm.slane %v372, 0
      %v392 = vunpack.c.l.b16 %v356
      %v393 = vunpack.c.l.b16 %v357
      %v394 = vunpack.c.l.b16 %v358
      %v395 = vunpack.c.l.b16 %v359
      %v396 = vunpack.c.l.b16 %v360
      %v397 = vunpack.c.l.b16 %v361
      %v398 = vunpack.c.l.b16 %v362
      %v399 = vunpack.c.l.b16 %v363
      %v400 = vunpack.c.l.b16 %v364
      %v401 = vunpack.c.l.b16 %v365
      %v402 = vunpack.c.l.b16 %v366
      %v403 = vunpack.c.l.b16 %v367
      %v404 = vunpack.c.l.b16 %v368
      %v405 = vunpack.c.l.b16 %v369
      %v406 = vunpack.c.l.b16 %v370
      %v407 = vunpack.c.l.b16 %v371
      %v408 = vpack.c.b16 %v393, %v392
      %v409 = vpack.c.b16 %v395, %v394
      %v410 = vpack.c.b16 %v397, %v396
      %v411 = vpack.c.b16 %v399, %v398
      %v412 = vpack.c.b16 %v401, %v400
      %v413 = vpack.c.b16 %v403, %v402
      %v414 = vpack.c.b16 %v405, %v404
      %v415 = vpack.c.b16 %v407, %v406
      %424 = vmatpush.bf16.msra.mxu0 %v415
      %425 = vmatpush.bf16.msra.mxu0 %v414
      %426 = vmatpush.bf16.msra.mxu0 %v413
      %427 = vmatpush.bf16.msra.mxu0 %v412
      %428 = vmatpush.bf16.msra.mxu0 %v411
      %429 = vmatpush.bf16.msra.mxu0 %v410
      %430 = vmatpush.bf16.msra.mxu0 %v409
      %431 = vmatpush.bf16.msra.mxu0 %v408
      %432 = vmatmul.bf16.gmra.mxu0 %v352
      %v433 = vpop.f32.mrf.mxu0
      %v434 = vadd.f32 %v374, %v433
      %v435 = vpop.f32.mrf.mxu0
      %v436 = vadd.f32 %v374, %v435
      %437 = vmatmul.bf16.gmra.mxu0 %v353
      %v438 = vpop.f32.mrf.mxu0
      %v439 = vadd.f32 %v374, %v438
      %v440 = vpop.f32.mrf.mxu0
      %v441 = vadd.f32 %v374, %v440
      %442 = vmatmul.bf16.gmra.mxu0 %v354
      %v443 = vpop.f32.mrf.mxu0
      %v444 = vadd.f32 %v374, %v443
      %v445 = vpop.f32.mrf.mxu0
      %v446 = vadd.f32 %v374, %v445
      %447 = vmatmul.bf16.gmra.mxu0 %v355
      %v448 = vpop.f32.mrf.mxu0
      %v449 = vadd.f32 %v374, %v448
      %v450 = vpop.f32.mrf.mxu0
      %v451 = vadd.f32 %v374, %v450
      %452 = vdwg.mxu0
      %vm453 = vcmask 130048
      %454 = vst.msk [vmem:[%s261] sm:$0xff] %vm453, %v434
      %455 = vst.msk [vmem:[%s261 + $0x8] sm:$0xff] %vm453, %v436
      %456 = vst.msk [vmem:[%s261 + $0x10] sm:$0xff] %vm453, %v439
      %457 = vst.msk [vmem:[%s261 + $0x18] sm:$0xff] %vm453, %v441
      %458 = vst.msk [vmem:[%s261 + $0x20] sm:$0xff] %vm453, %v444
      %459 = vst.msk [vmem:[%s261 + $0x28] sm:$0xff] %vm453, %v446
      %460 = vst.msk [vmem:[%s261 + $0x30] sm:$0xff] %vm453, %v449
      %461 = vst.msk [vmem:[%s261 + $0x38] sm:$0xff] %vm453, %v451
      %470 = vrot.lane.b32.xlu0 %v434, 112
      %v471 = vpop.permute.xlu0 %470
      %472 = vrot.lane.b32.xlu0 %v436, 112
      %v473 = vpop.permute.xlu0 %472
      %474 = vrot.lane.b32.xlu0 %v439, 112
      %v475 = vpop.permute.xlu0 %474
      %476 = vrot.lane.b32.xlu0 %v441, 112
      %v477 = vpop.permute.xlu0 %476
      %478 = vrot.lane.b32.xlu0 %v444, 112
      %v479 = vpop.permute.xlu0 %478
      %480 = vrot.lane.b32.xlu0 %v446, 112
      %v481 = vpop.permute.xlu0 %480
      %482 = vrot.lane.b32.xlu0 %v449, 112
      %v483 = vpop.permute.xlu0 %482
      %484 = vrot.lane.b32.xlu0 %v451, 112
      %v485 = vpop.permute.xlu0 %484
      %494 = vst.msk [vmem:[%s267] sm:$0xff] %vm453, %v471
      %495 = vst.msk [vmem:[%s267 + $0x8] sm:$0xff] %vm453, %v473
      %496 = vst.msk [vmem:[%s267 + $0x10] sm:$0xff] %vm453, %v475
      %497 = vst.msk [vmem:[%s267 + $0x18] sm:$0xff] %vm453, %v477
      %498 = vst.msk [vmem:[%s267 + $0x20] sm:$0xff] %vm453, %v479
      %499 = vst.msk [vmem:[%s267 + $0x28] sm:$0xff] %vm453, %v481
      %500 = vst.msk [vmem:[%s267 + $0x30] sm:$0xff] %vm453, %v483
      %501 = vst.msk [vmem:[%s267 + $0x38] sm:$0xff] %vm453, %v485
      %s502 = smul.u32 8, %s18
      %p503 = scmp.lt.s32.totalorder %s502, 31
      %s504 = scalar_select %p503, %s502, 31
      %s505 = smul.addr %s504, 8
      %s506 = scalar_lea.vmem %s5, %s505
      %s507 = smul.u32 8, %s18
      %p508 = scmp.lt.s32.totalorder %s507, 31
      %s509 = scalar_select %p508, %s507, 31
      %s510 = smul.addr %s509, 8
      %s511 = scalar_lea.vmem %s6, %s510
      // Predicated region
      $region41: #{tpu_custom_call.1} parent=39 // pred_check
        %p512 = pneg %p146
      $region42: #{tpu_custom_call.1} parent=39 // pred_check_branch
        %514 = sbr.rel (%p512) target = $region44
      $region43: #{tpu_custom_call.1} parent=39 // pred_region
        %s515 = smul.u32 8, %s18
      $region44: #{tpu_custom_call.1} parent=39 // pred_fallthru
        _
      // Predicated region
      $region45: #{tpu_custom_call.1} parent=39 // pred_check
        %p516 = pneg %p172
      $region46: #{tpu_custom_call.1} parent=39 // pred_check_branch
        %518 = sbr.rel (%p516) target = $region48
      $region47: #{tpu_custom_call.1} parent=39 // pred_region
        %s519 = smul.u32 8, %s18
      $region48: #{tpu_custom_call.1} parent=39 // pred_fallthru
        _
    $region40: #{tpu_custom_call.1} parent=5 // pred_fallthru
      _
    %p520 = scmp.le.s32.totalorder 2, %s13
    // Predicated region
    $region49: #{tpu_custom_call.1} parent=5 // pred_check
      %p521 = pneg %p520
    $region50: #{tpu_custom_call.1} parent=5 // pred_check_branch
      %523 = sbr.rel (%p521) target = $region52
    $region51: #{tpu_custom_call.1} parent=5 // pred_region
      %s524 = ssub.s32 %s13, 2
      // Predicated region
      $region53: #{tpu_custom_call.1} parent=51 // pred_check
        %p525 = pneg %p152
      $region54: #{tpu_custom_call.1} parent=51 // pred_check_branch
        %527 = sbr.rel (%p525) target = $region56
      $region55: #{tpu_custom_call.1} parent=51 // pred_region
        %s528 = smul.u32 8, %s19
        %p529 = scmp.lt.s32.totalorder %s528, 31
        %s530 = scalar_select %p529, %s528, 31
        %s531 = smul.addr %s530, 8
        %s532 = scalar_lea.vmem %s5, %s531
      $region56: #{tpu_custom_call.1} parent=51 // pred_fallthru
        _
      // Predicated region
      $region57: #{tpu_custom_call.1} parent=51 // pred_check
        %p533 = pneg %p178
      $region58: #{tpu_custom_call.1} parent=51 // pred_check_branch
        %535 = sbr.rel (%p533) target = $region60
      $region59: #{tpu_custom_call.1} parent=51 // pred_region
        %s536 = smul.u32 8, %s19
        %p537 = scmp.lt.s32.totalorder %s536, 31
        %s538 = scalar_select %p537, %s536, 31
        %s539 = smul.addr %s538, 8
        %s540 = scalar_lea.vmem %s6, %s539
      $region60: #{tpu_custom_call.1} parent=51 // pred_fallthru
        _
    $region52: #{tpu_custom_call.1} parent=5 // pred_fallthru
      _
  $region6: #{tpu_custom_call.1} parent=0 // loop_footer
    %s17 = sadd.s32 1, %s13
  $region7: #{tpu_custom_call.1} parent=0 // loop_footer_branch
    %12 = sbr.rel target = $region3
  $region8: #{tpu_custom_call.1} parent=0 // loop_exit
    _

</llo_original>
